<compile_context>
chip_gen: v7x
topology: tpu7x:2x2x1
jax: 0.10.0
libtpu: 0.0.40
codegen_flags: <defaults>
</compile_context>

<pallas_src>
import functools

import jax
import jax.numpy as jnp
from jax.experimental import pallas as pl
from jax.experimental.pallas import tpu as pltpu

_LANE_CANDIDATES = (1024, 512, 256, 128)   # lane-dense widths (multiples of 128)
_TARGET_BLOCK_BYTES = 4 * 1024 * 1024      # ~4 MiB / input block (v7x-safe)
_VMEM_LIMIT_BYTES = 32 * 1024 * 1024


def _sc_partials_kernel(x_ref, y_ref, num_ref, den_ref, *,
                        blk_rows, lanes, valid_rows, mask_needed):
    """One grid step: write this block's partial sum((y-x)^2) and sum(y^2)."""
    x = x_ref[...].astype(jnp.float32)
    y = y_ref[...].astype(jnp.float32)
    d = y - x
    dd = d * d
    yy = y * y
    if mask_needed:
        # `valid_rows` is static; zero the garbage rows of the partial edge
        # block.  Pure VPU work; the kernel stays HBM-bound.
        row = jax.lax.broadcasted_iota(jnp.int32, (blk_rows, lanes), 0)
        ok = (pl.program_id(0) * blk_rows + row) < valid_rows
        dd = jnp.where(ok, dd, 0.0)
        yy = jnp.where(ok, yy, 0.0)
    num_ref[...] = jnp.sum(dd, axis=(0, 1), keepdims=True).reshape(1, 1, 1)
    den_ref[...] = jnp.sum(yy, axis=(0, 1), keepdims=True).reshape(1, 1, 1)


def spectral_convergence_loss(x_mag, y_mag):
    """Pallas implementation of SpectralConvergengeLoss.forward.

    Args:
      x_mag: (B, frames, freq) predicted magnitude spectrogram (f32 or bf16).
      y_mag: (B, frames, freq) ground-truth magnitude spectrogram.
    Returns:
      scalar f32 loss = ||y - x||_F / ||y||_F.
    """
    assert x_mag.shape == y_mag.shape
    n = int(x_mag.size)
    x_flat = x_mag.reshape(-1)
    y_flat = y_mag.reshape(-1)

    # Pick the widest lane-dense width that divides N exactly (no padding).
    lanes = None
    for cand in _LANE_CANDIDATES:
        if n % cand == 0:
            lanes = cand
            break

    if lanes is None:
        # No lane-dense factorization: push everything except a tiny (<128
        # element) tail through the kernel; the tail is summed in plain JAX.
        lanes = 128
        n_main = (n // lanes) * lanes
    else:
        n_main = n

    tail_num = jnp.zeros((), jnp.float32)
    tail_den = jnp.zeros((), jnp.float32)
    if n_main < n:
        tx = x_flat[n_main:].astype(jnp.float32)
        ty = y_flat[n_main:].astype(jnp.float32)
        tail_num = jnp.sum((ty - tx) * (ty - tx))
        tail_den = jnp.sum(ty * ty)

    if n_main == 0:
        # Degenerate (< 128 element) input: nothing worth a kernel launch.
        return jnp.sqrt(tail_num) / jnp.sqrt(tail_den)

    rows = n_main // lanes
    x2 = x_flat[:n_main].reshape(rows, lanes)
    y2 = y_flat[:n_main].reshape(rows, lanes)

    # ~4 MiB blocks; blk_rows is a multiple of 8 unless it equals `rows`.
    target_rows = max(8, _TARGET_BLOCK_BYTES // (4 * lanes))
    blk_rows = min(rows, target_rows)
    grid = (pl.cdiv(rows, blk_rows),)
    mask_needed = (rows % blk_rows) != 0

    kernel = functools.partial(
        _sc_partials_kernel,
        blk_rows=blk_rows, lanes=lanes, valid_rows=rows,
        mask_needed=mask_needed)

    g = grid[0]
    num_parts, den_parts = pl.pallas_call(
        kernel,
        out_shape=(jax.ShapeDtypeStruct((g, 1, 1), jnp.float32),
                   jax.ShapeDtypeStruct((g, 1, 1), jnp.float32)),
        grid=grid,
        in_specs=[
            pl.BlockSpec((blk_rows, lanes), lambda i: (i, 0)),
            pl.BlockSpec((blk_rows, lanes), lambda i: (i, 0)),
        ],
        out_specs=(
            pl.BlockSpec((1, 1, 1), lambda i: (i, 0, 0)),
            pl.BlockSpec((1, 1, 1), lambda i: (i, 0, 0)),
        ),
        compiler_params=pltpu.CompilerParams(
            # Each grid step writes its own partials: truly parallel, so the
            # axis can be sharded across both v7x TensorCores.
            dimension_semantics=("parallel",),
            vmem_limit_bytes=_VMEM_LIMIT_BYTES,
        ),
    )(x2, y2)

    num = jnp.sum(num_parts) + tail_num
    den = jnp.sum(den_parts) + tail_den
    # NOTE: all-zero y_mag yields inf/nan, matching the PyTorch reference.
    return jnp.sqrt(num) / jnp.sqrt(den)


def _reference(x_mag, y_mag):
    return (jnp.linalg.norm((y_mag - x_mag).reshape(-1))
            / jnp.linalg.norm(y_mag.reshape(-1)))


if __name__ == "__main__":
    key = jax.random.PRNGKey(0)
    kx, ky = jax.random.split(key)

    # Small (B, #frames, #freq_bins) magnitude spectrograms (>= 0).
    B, T, F = 2, 16, 64
    x_mag = jnp.abs(jax.random.normal(kx, (B, T, F), dtype=jnp.float32))
    y_mag = jnp.abs(jax.random.normal(ky, (B, T, F), dtype=jnp.float32))

    loss = jax.block_until_ready(spectral_convergence_loss(x_mag, y_mag))
    ref = _reference(x_mag, y_mag)
    assert jnp.allclose(loss, ref, rtol=1e-5, atol=1e-6), (loss, ref)

    # Exercise the multi-block grid + masked partial edge block (F=513).
    k1, k2 = jax.random.split(ky)
    x_b = jnp.abs(jax.random.normal(k1, (8, 400, 513), dtype=jnp.float32))
    y_b = jnp.abs(jax.random.normal(k2, (8, 400, 513), dtype=jnp.float32))
    loss_b = jax.block_until_ready(spectral_convergence_loss(x_b, y_b))
    ref_b = _reference(x_b, y_b)
    assert jnp.allclose(loss_b, ref_b, rtol=1e-4, atol=1e-6), (loss_b, ref_b)

    # Exercise the tiny-tail path (N not a multiple of 128).
    k3, k4 = jax.random.split(k1)
    x_t = jnp.abs(jax.random.normal(k3, (2, 7, 65), dtype=jnp.float32))
    y_t = jnp.abs(jax.random.normal(k4, (2, 7, 65), dtype=jnp.float32))
    loss_t = jax.block_until_ready(spectral_convergence_loss(x_t, y_t))
    ref_t = _reference(x_t, y_t)
    assert jnp.allclose(loss_t, ref_t, rtol=1e-5, atol=1e-6), (loss_t, ref_t)

    print("KERNEL_OK")
</pallas_src>

<mosaic_0001>
module attributes {stable_mosaic.version = 11 : i64} {
  func.func @_sc_partials_kernel(%arg0: i32, %arg1: memref<2x1024xf32, #tpu.memory_space<vmem>>, %arg2: memref<2x1024xf32, #tpu.memory_space<vmem>>, %arg3: memref<1x1x1xf32, #tpu.memory_space<vmem>>, %arg4: memref<1x1x1xf32, #tpu.memory_space<vmem>>) attributes {dimension_semantics = [#tpu.dimension_semantics<parallel>], iteration_bounds = array<i64: 1>, scalar_prefetch = 0 : i64, scratch_operands = 0 : i64, tpu.core_type = #tpu.core_type<tc>, window_params = [{transform_indices = @transform_0, window_bounds = array<i64: 2, 1024>}, {transform_indices = @transform_1, window_bounds = array<i64: 2, 1024>}, {transform_indices = @transform_2, window_bounds = array<i64: 1, 1, 1>}, {transform_indices = @transform_3, window_bounds = array<i64: 1, 1, 1>}]} {
    %c0 = arith.constant 0 : index
    %c0_0 = arith.constant 0 : index
    %0 = vector.load %arg1[%c0, %c0_0] : memref<2x1024xf32, #tpu.memory_space<vmem>>, vector<2x1024xf32>
    %c0_1 = arith.constant 0 : index
    %c0_2 = arith.constant 0 : index
    %1 = vector.load %arg2[%c0_1, %c0_2] : memref<2x1024xf32, #tpu.memory_space<vmem>>, vector<2x1024xf32>
    %2 = arith.subf %1, %0 : vector<2x1024xf32>
    %3 = arith.mulf %2, %2 : vector<2x1024xf32>
    %4 = arith.mulf %1, %1 : vector<2x1024xf32>
    %5 = vector.shape_cast %3 : vector<2x1024xf32> to vector<1x2x1024xf32>
    %cst = arith.constant dense<0.000000e+00> : vector<1xf32>
    %6 = vector.multi_reduction <add>, %5, %cst [1, 2] : vector<1x2x1024xf32> to vector<1xf32>
    %7 = vector.shape_cast %6 : vector<1xf32> to vector<1x1x1xf32>
    %8 = vector.extract %7[0, 0, 0] : f32 from vector<1x1x1xf32>
    %9 = vector.broadcast %8 : f32 to vector<1x1xf32>
    %10 = vector.shape_cast %9 : vector<1x1xf32> to vector<1x1x1xf32>
    %c0_3 = arith.constant 0 : index
    %c0_4 = arith.constant 0 : index
    %c0_5 = arith.constant 0 : index
    %11 = vector.load %arg3[%c0_3, %c0_4, %c0_5] : memref<1x1x1xf32, #tpu.memory_space<vmem>>, vector<1x1x1xf32>
    tpu.vector_store %arg3[%c0_3, %c0_4, %c0_5], %10 {strides = array<i32>} : memref<1x1x1xf32, #tpu.memory_space<vmem>>, vector<1x1x1xf32>,
    %12 = vector.shape_cast %4 : vector<2x1024xf32> to vector<1x2x1024xf32>
    %cst_6 = arith.constant dense<0.000000e+00> : vector<1xf32>
    %13 = vector.multi_reduction <add>, %12, %cst_6 [1, 2] : vector<1x2x1024xf32> to vector<1xf32>
    %14 = vector.shape_cast %13 : vector<1xf32> to vector<1x1x1xf32>
    %15 = vector.extract %14[0, 0, 0] : f32 from vector<1x1x1xf32>
    %16 = vector.broadcast %15 : f32 to vector<1x1xf32>
    %17 = vector.shape_cast %16 : vector<1x1xf32> to vector<1x1x1xf32>
    %c0_7 = arith.constant 0 : index
    %c0_8 = arith.constant 0 : index
    %c0_9 = arith.constant 0 : index
    %18 = vector.load %arg4[%c0_7, %c0_8, %c0_9] : memref<1x1x1xf32, #tpu.memory_space<vmem>>, vector<1x1x1xf32>
    tpu.vector_store %arg4[%c0_7, %c0_8, %c0_9], %17 {strides = array<i32>} : memref<1x1x1xf32, #tpu.memory_space<vmem>>, vector<1x1x1xf32>,
    return
  }
  func.func @transform_0(%arg0: i32) -> (i32, i32) {
    %c0_i32 = arith.constant 0 : i32
    %c0_i32_0 = arith.constant 0 : i32
    return %arg0, %c0_i32 : i32, i32
  }
  func.func @transform_1(%arg0: i32) -> (i32, i32) {
    %c0_i32 = arith.constant 0 : i32
    %c0_i32_0 = arith.constant 0 : i32
    return %arg0, %c0_i32 : i32, i32
  }
  func.func @transform_2(%arg0: i32) -> (i32, i32, i32) {
    %c0_i32 = arith.constant 0 : i32
    %c0_i32_0 = arith.constant 0 : i32
    %c0_i32_1 = arith.constant 0 : i32
    return %arg0, %c0_i32, %c0_i32_0 : i32, i32, i32
  }
  func.func @transform_3(%arg0: i32) -> (i32, i32, i32) {
    %c0_i32 = arith.constant 0 : i32
    %c0_i32_0 = arith.constant 0 : i32
    %c0_i32_1 = arith.constant 0 : i32
    return %arg0, %c0_i32, %c0_i32_0 : i32, i32, i32
  }
}

</mosaic_0001>

<llo_original>
// kernel: tpu_custom_call.1
$region0: #{tpu_custom_call.1}
  #allocation0 [shape = 'u32[]', space=smem, size = 0x4, offset = 0x4, fixed_abs, tag = 'smem constant byte address 0x4 - core index']
  #allocation1 [shape = 'u32[144,128]{1,0:T(1,128)}', space=vmem, size = 0x12000, scoped, tag = 'internal scratch']
  %s0 = inlined_call_operand.hbm [shape: f32[2,1024], index: 0, kind: input, shape index: {}]
  %s1 = inlined_call_operand.hbm [shape: f32[2,1024], index: 1, kind: input, shape index: {}]
  %s2 = inlined_call_operand.hbm [shape: f32[1,1,1], index: 2, kind: output, shape index: {0}]
  %s3 = inlined_call_operand.hbm [shape: f32[1,1,1], index: 3, kind: output, shape index: {1}]
  %4 = xla_tuple %s2, %s3
  %s5 = sld [smem:[#allocation0]]
  $region34: #{tpu_custom_call.1} parent=0
    _
  %s7 = ssub.s32 1, %s5
  %s8 = scalar_select 0, %s7, %s5
  $region1: #{tpu_custom_call.1} parent=0
    #allocation2 [shape = 'u8[8192]{0}', space=vmem, size = 0x2000, scoped, tag = 'input window, operand 0, single buffered']
    #allocation3 [shape = 's32[1]{0}', space=sflag, size = 0x4, scoped, tag = 'scoped memory for tpu_custom_call.1']
    #allocation4 [shape = 's32[1]{0}', space=sflag, size = 0x4, scoped, tag = 'scoped memory for tpu_custom_call.1']
    #allocation5 [shape = 'u8[8192]{0}', space=vmem, size = 0x2000, scoped, tag = 'input window, operand 1, single buffered']
    #allocation6 [shape = 's32[1]{0}', space=sflag, size = 0x4, scoped, tag = 'scoped memory for tpu_custom_call.1']
    #allocation7 [shape = 'u8[512]{0}', space=vmem, size = 0x400, scoped, tag = 'output window, operand 0, single buffered']
    #allocation8 [shape = 'u8[512]{0}', space=vmem, size = 0x400, scoped, tag = 'output window, operand 1, single buffered']
    #allocation9 [shape = 's32[1]{0}', space=sflag, size = 0x4, scoped, tag = 'scoped memory for tpu_custom_call.1']
    %9 = vsyncpa [#allocation3], 0
    %10 = vsyncpa [#allocation6], 0
    %11 = vsyncpa [#allocation4], 0
    %12 = vsyncpa [#allocation9], 0
    // Predicated region
    $region2: #{tpu_custom_call.1} parent=1 // pred_check
      _
    $region3: #{tpu_custom_call.1} parent=1 // pred_check_branch
      %14 = sbr.rel (0) target = $region5
    $region4: #{tpu_custom_call.1} parent=1 // pred_region
      %s16 = ssub.s32 256, 256
      %17 = vsyncadd [#allocation3], %s16
      %s19 = sshll.u32 [#allocation2], 4
      %s20 = int_to_ptr.vmem [resolvable:$true] %s19
      %22 = dma.hbm_to_vmem [thread:$0]  %s0, 256, %s20, [#allocation3]
    $region5: #{tpu_custom_call.1} parent=1 // pred_fallthru
      _
    // Predicated region
    $region6: #{tpu_custom_call.1} parent=1 // pred_check
      _
    $region7: #{tpu_custom_call.1} parent=1 // pred_check_branch
      %24 = sbr.rel (0) target = $region9
    $region8: #{tpu_custom_call.1} parent=1 // pred_region
      %s26 = ssub.s32 256, 256
      %27 = vsyncadd [#allocation6], %s26
      %s29 = sshll.u32 [#allocation5], 4
      %s30 = int_to_ptr.vmem [resolvable:$true] %s29
      %32 = dma.hbm_to_vmem [thread:$0]  %s1, 256, %s30, [#allocation6]
    $region9: #{tpu_custom_call.1} parent=1 // pred_fallthru
      _
    // Predicated region
    $region10: #{tpu_custom_call.1} parent=1 // pred_check
      _
    $region11: #{tpu_custom_call.1} parent=1 // pred_check_branch
      %34 = sbr.rel (0) target = $region13
    $region12: #{tpu_custom_call.1} parent=1 // pred_region
      %35 = dma.done [#allocation3], 256
    $region13: #{tpu_custom_call.1} parent=1 // pred_fallthru
      _
    // Predicated region
    $region14: #{tpu_custom_call.1} parent=1 // pred_check
      _
    $region15: #{tpu_custom_call.1} parent=1 // pred_check_branch
      %37 = sbr.rel (0) target = $region17
    $region16: #{tpu_custom_call.1} parent=1 // pred_region
      %38 = dma.done [#allocation6], 256
    $region17: #{tpu_custom_call.1} parent=1 // pred_fallthru
      _
    %v39 = vld [vmem:[#allocation2] sm:$0xff]
    %v40 = vld [vmem:[#allocation2 + $0x8] sm:$0xff]
    %v41 = vld [vmem:[#allocation5] sm:$0xff]
    %v42 = vld [vmem:[#allocation5 + $0x8] sm:$0xff]
    %v43 = vsub.f32 %v41, %v39
    %v44 = vsub.f32 %v42, %v40
    %v45 = vmul.f32 %v43, %v43
    %v46 = vmul.f32 %v44, %v44
    %v47 = vmul.f32 %v41, %v41
    %v48 = vmul.f32 %v42, %v42
    %v51 = vcombine.high %v45, %v45
    %v53 = vunpack.c.l.s4 1983009808
    %v54 = vunpack.c.0.s8 %v53
    %v55 = vlaneseq
    %v56 = vshrl.u32 %v55, 7
    %v57 = vsub.s32 %v54, %v56
    %v58 = vrot.slane %v45, %v57
    %v60 = vunpack.c.l.s4 1983009808
    %v61 = vunpack.c.0.s8 %v60
    %v62 = vlaneseq
    %v63 = vshrl.u32 %v62, 7
    %v64 = vsub.s32 %v61, %v63
    %v65 = vrot.slane %v51, %v64
    %v66 = vcombine.high %v58, %v58
    %v67 = vcombine.high %v65, %v65
    %v68 = vcombine.high %v46, %v46
    %v70 = vunpack.c.l.s4 1983009808
    %v71 = vunpack.c.0.s8 %v70
    %v72 = vlaneseq
    %v73 = vshrl.u32 %v72, 7
    %v74 = vsub.s32 %v71, %v73
    %v75 = vrot.slane %v46, %v74
    %v77 = vunpack.c.l.s4 1983009808
    %v78 = vunpack.c.0.s8 %v77
    %v79 = vlaneseq
    %v80 = vshrl.u32 %v79, 7
    %v81 = vsub.s32 %v78, %v80
    %v82 = vrot.slane %v68, %v81
    %v83 = vcombine.high %v75, %v75
    %v84 = vcombine.high %v82, %v82
    %vm93 = vcmask 1041408
    %v94 = vsel %vm93, %v58, 0.0
    %v95 = vsel %vm93, %v66, 0.0
    %v96 = vadd.f32 %v94, %v95
    %v97 = vsel %vm93, %v65, 0.0
    %v98 = vadd.f32 %v96, %v97
    %v99 = vsel %vm93, %v67, 0.0
    %v100 = vadd.f32 %v98, %v99
    %v101 = vsel %vm93, %v75, 0.0
    %v102 = vadd.f32 %v100, %v101
    %v103 = vsel %vm93, %v83, 0.0
    %v104 = vadd.f32 %v102, %v103
    %v105 = vsel %vm93, %v82, 0.0
    %v106 = vadd.f32 %v104, %v105
    %v107 = vsel %vm93, %v84, 0.0
    %v108 = vadd.f32 %v106, %v107
    %109 = vadd.xlane.f32.xlu0 %v108
    %v110 = vpop.xlane.xlu0 %109
    %v111 = vrot.slane %v110, 4
    %v112 = vadd.f32 %v110, %v111
    %v113 = vrot.slane %v112, 2
    %v114 = vadd.f32 %v112, %v113
    %v115 = vrot.slane %v114, 1
    %v116 = vadd.f32 %v114, %v115
    %s117 = vtos %v116
    %v118 = vstv %s117
    %vm119 = vcmask 0
    %120 = vst.msk [vmem:[#allocation7] sm:$0x1] %vm119, %v118
    %v123 = vcombine.high %v47, %v47
    %v125 = vunpack.c.l.s4 1983009808
    %v126 = vunpack.c.0.s8 %v125
    %v127 = vlaneseq
    %v128 = vshrl.u32 %v127, 7
    %v129 = vsub.s32 %v126, %v128
    %v130 = vrot.slane %v47, %v129
    %v132 = vunpack.c.l.s4 1983009808
    %v133 = vunpack.c.0.s8 %v132
    %v134 = vlaneseq
    %v135 = vshrl.u32 %v134, 7
    %v136 = vsub.s32 %v133, %v135
    %v137 = vrot.slane %v123, %v136
    %v138 = vcombine.high %v130, %v130
    %v139 = vcombine.high %v137, %v137
    %v140 = vcombine.high %v48, %v48
    %v142 = vunpack.c.l.s4 1983009808
    %v143 = vunpack.c.0.s8 %v142
    %v144 = vlaneseq
    %v145 = vshrl.u32 %v144, 7
    %v146 = vsub.s32 %v143, %v145
    %v147 = vrot.slane %v48, %v146
    %v149 = vunpack.c.l.s4 1983009808
    %v150 = vunpack.c.0.s8 %v149
    %v151 = vlaneseq
    %v152 = vshrl.u32 %v151, 7
    %v153 = vsub.s32 %v150, %v152
    %v154 = vrot.slane %v140, %v153
    %v155 = vcombine.high %v147, %v147
    %v156 = vcombine.high %v154, %v154
    %v165 = vsel %vm93, %v130, 0.0
    %v166 = vsel %vm93, %v138, 0.0
    %v167 = vadd.f32 %v165, %v166
    %v168 = vsel %vm93, %v137, 0.0
    %v169 = vadd.f32 %v167, %v168
    %v170 = vsel %vm93, %v139, 0.0
    %v171 = vadd.f32 %v169, %v170
    %v172 = vsel %vm93, %v147, 0.0
    %v173 = vadd.f32 %v171, %v172
    %v174 = vsel %vm93, %v155, 0.0
    %v175 = vadd.f32 %v173, %v174
    %v176 = vsel %vm93, %v154, 0.0
    %v177 = vadd.f32 %v175, %v176
    %v178 = vsel %vm93, %v156, 0.0
    %v179 = vadd.f32 %v177, %v178
    %180 = vadd.xlane.f32.xlu0 %v179
    %v181 = vpop.xlane.xlu0 %180
    %v182 = vrot.slane %v181, 4
    %v183 = vadd.f32 %v181, %v182
    %v184 = vrot.slane %v183, 2
    %v185 = vadd.f32 %v183, %v184
    %v186 = vrot.slane %v185, 1
    %v187 = vadd.f32 %v185, %v186
    %s188 = vtos %v187
    %v189 = vstv %s188
    %190 = vst.msk [vmem:[#allocation8] sm:$0x1] %vm119, %v189
    // Predicated region
    $region18: #{tpu_custom_call.1} parent=1 // pred_check
      _
    $region19: #{tpu_custom_call.1} parent=1 // pred_check_branch
      %192 = sbr.rel (0) target = $region21
    $region20: #{tpu_custom_call.1} parent=1 // pred_region
      %s194 = ssub.s32 16, 16
      %195 = vsyncadd [#allocation4], %s194
      %s197 = sshll.u32 [#allocation7], 4
      %s198 = int_to_ptr.vmem [resolvable:$true] %s197
      %200 = dma.vmem_to_hbm [thread:$0]  %s198, 16, %s2, [#allocation4]
    $region21: #{tpu_custom_call.1} parent=1 // pred_fallthru
      _
    // Predicated region
    $region22: #{tpu_custom_call.1} parent=1 // pred_check
      _
    $region23: #{tpu_custom_call.1} parent=1 // pred_check_branch
      %202 = sbr.rel (0) target = $region25
    $region24: #{tpu_custom_call.1} parent=1 // pred_region
      %s204 = ssub.s32 16, 16
      %205 = vsyncadd [#allocation9], %s204
      %s207 = sshll.u32 [#allocation8], 4
      %s208 = int_to_ptr.vmem [resolvable:$true] %s207
      %210 = dma.vmem_to_hbm [thread:$0]  %s208, 16, %s3, [#allocation9]
    $region25: #{tpu_custom_call.1} parent=1 // pred_fallthru
      _
    // Predicated region
    $region26: #{tpu_custom_call.1} parent=1 // pred_check
      _
    $region27: #{tpu_custom_call.1} parent=1 // pred_check_branch
      %212 = sbr.rel (0) target = $region29
    $region28: #{tpu_custom_call.1} parent=1 // pred_region
      %213 = dma.done [#allocation4], 16
    $region29: #{tpu_custom_call.1} parent=1 // pred_fallthru
      _
    // Predicated region
    $region30: #{tpu_custom_call.1} parent=1 // pred_check
      _
    $region31: #{tpu_custom_call.1} parent=1 // pred_check_branch
      %215 = sbr.rel (0) target = $region33
    $region32: #{tpu_custom_call.1} parent=1 // pred_region
      %216 = dma.done [#allocation9], 16
    $region33: #{tpu_custom_call.1} parent=1 // pred_fallthru
      _
    %217 = vsyncpa [#allocation3], 1
    %218 = vsyncpa [#allocation6], 1
    %219 = vsyncpa [#allocation4], 1
    %220 = vsyncpa [#allocation9], 1

</llo_original>
